<compile_context>
chip_gen: v6e
topology: v6e:2x2x1
jax: 0.10.0
libtpu: 0.0.40
codegen_flags: <defaults>
</compile_context>

<pallas_src>
import jax
import jax.numpy as jnp
from jax.experimental import pallas as pl
from jax.experimental.pallas import tpu as pltpu


_LANE = 128
_DEFAULT_TILE_B = 256  # MXU-native tile on v6e/v7x


def _round_up(x, m):
    return (x + m - 1) // m * m


def _vmem_capacity_bytes():
    try:
        return int(pltpu.get_tpu_info().vmem_capacity_bytes)
    except Exception:
        return 64 << 20  # conservative fallback (v7x per-TC physical VMEM)


def prepare_linear_softmax_params(w, b, *, max_tile_b=_DEFAULT_TILE_B, out_itemsize=4):
    """One-time preprocessing of the wrapped Linear's parameters.

    Hoisted out of the forward pass so each call does NOT re-pay the extra HBM
    read+write of W for class padding / bf16 casting.
    """
    H, C = w.shape
    C_pad = _round_up(C, _LANE)  # lane-dense output stores (unmasked vst)
    b = jnp.reshape(b, (1, C)).astype(jnp.float32)
    if C_pad != C:
        w = jnp.pad(w, ((0, 0), (0, C_pad - C)))
        # Padded classes get a huge negative bias -> exp underflows to exactly 0.
        # Valid because the bias add and exp stay in f32 inside the kernel.
        b = jnp.pad(b, ((0, 0), (0, C_pad - C)), constant_values=-1e30)
    # bf16 MXU operands (~4x throughput on v6e/v7x), f32 accumulation in-kernel.
    # TODO(synk): int8 weights (per-channel scales) on v5e/v6e, fp8 on v7x, for
    # large MXU-bound heads where quantization is acceptable.
    w = w.astype(jnp.bfloat16)

    # --- choose hidden-dim tiling (tk) against the per-chip VMEM budget ---
    budget = int(_vmem_capacity_bytes() * 0.85)  # leave headroom for Mosaic scratch

    def vmem_bytes(tk, w_bufs):
        return (w_bufs * tk * C_pad * 2                   # bf16 weight buffer(s)
                + 2 * C_pad * 4                           # bias
                + 2 * max_tile_b * tk * 4                 # f32 x tiles (double-buffered)
                + 2 * max_tile_b * C_pad * out_itemsize   # output tiles
                + max_tile_b * C_pad * 4)                 # f32 accumulator scratch

    if vmem_bytes(H, 1) <= budget:
        tk, H_pad = H, H                   # whole W resident, single K step
    else:
        # K-split: stream W in (tk, C_pad) chunks (these must be double-buffered).
        tk = 128
        for cand in (2048, 1024, 512, 256, 128):
            if vmem_bytes(cand, 2) <= budget:
                tk = cand
                break
        # TODO(synk): for extreme C_pad also shrink max_tile_b / split the class dim.
        H_pad = _round_up(H, tk)
        if H_pad != H:
            w = jnp.pad(w, ((0, H_pad - H), (0, 0)))  # zero rows contribute 0 to the dot

    return dict(w=w, b=b, C=C, C_pad=C_pad, H=H, H_pad=H_pad, tk=tk,
                max_tile_b=max_tile_b, vmem_budget=budget)


def _linear_softmax_kernel(x_ref, w_ref, b_ref, o_ref, acc_ref):
    k = pl.program_id(1)

    @pl.when(k == 0)
    def _init():
        acc_ref[...] = jnp.zeros_like(acc_ref)

    # x kept in its HBM dtype; the bf16 cast happens in-register and hides under
    # the MXU. W is pre-cast bf16; accumulation is f32.
    acc_ref[...] += jnp.dot(x_ref[...].astype(jnp.bfloat16), w_ref[...],
                            preferred_element_type=jnp.float32)

    @pl.when(k == pl.num_programs(1) - 1)
    def _finalize():
        logits = acc_ref[...] + b_ref[...]             # (tb, Cp) + (1, Cp) broadcast
        m = jnp.max(logits, axis=-1, keepdims=True)
        # TODO(synk): optional bf16-input exp on v6e/v7x (bf16 EUP ~2x) when the
        # accuracy budget allows; keep f32 by default (and always on v5e).
        e = jnp.exp(logits - m)
        denom = jnp.sum(e, axis=-1, keepdims=True)
        # Exact normalization: the kernel is MXU/EUP-bound, so the divide is free
        # and rows sum to 1 to f32 precision.
        o_ref[...] = (e / denom).astype(o_ref.dtype)


def softmax_wrapper_forward(x, params, *, tile_b=None, out_dtype=None, trim=True):
    """softmax(x @ W + b, axis=-1) as one fused Pallas kernel."""
    B, H = x.shape
    assert H == params["H"]
    w, b = params["w"], params["b"]
    C, C_pad = params["C"], params["C_pad"]
    H_pad, tk = params["H_pad"], params["tk"]
    out_dtype = out_dtype or x.dtype  # bf16 output halves writeback/vst pressure (v5e)

    # Batch tiling: big MXU-friendly tiles, rounded to 16 (bf16 sublane packing),
    # and >=2 tiles whenever B allows so "parallel" shards across both v7x TCs.
    tile_b = tile_b or params["max_tile_b"]
    tile_b = max(16, min(_round_up(tile_b, 16), _round_up((B + 1) // 2, 16)))
    B_pad = _round_up(B, tile_b)
    if B_pad != B:
        x = jnp.pad(x, ((0, B_pad - B), (0, 0)))
    if H_pad != H:
        x = jnp.pad(x, ((0, 0), (0, H_pad - H)))

    num_b, num_k = B_pad // tile_b, H_pad // tk
    single_w = num_k == 1  # weight block is constant across the whole grid

    out_isz = jnp.dtype(out_dtype).itemsize
    est = ((1 if single_w else 2) * tk * C_pad * 2   # weight buffer(s)
           + 2 * C_pad * 4                           # bias
           + 2 * tile_b * tk * x.dtype.itemsize      # x tiles
           + 2 * tile_b * C_pad * out_isz            # output tiles
           + tile_b * C_pad * 4)                     # f32 accumulator scratch
    vmem_limit = int(min(params["vmem_budget"], max(32 << 20, 2 * est)))

    cost = pl.CostEstimate(
        flops=2 * B_pad * H_pad * C_pad,
        transcendentals=B_pad * C_pad + B_pad,  # exp + per-row reciprocal
        bytes_accessed=(x.size * x.dtype.itemsize + w.size * w.dtype.itemsize
                        + b.size * 4 + B_pad * C_pad * out_isz),
    )

    def run(w_buffers):
        if w_buffers == 1:
            w_spec = pl.BlockSpec((tk, C_pad), lambda i, k: (k, 0),
                                  pipeline_mode=pl.Buffered(1))
        else:
            w_spec = pl.BlockSpec((tk, C_pad), lambda i, k: (k, 0))
        return pl.pallas_call(
            _linear_softmax_kernel,
            out_shape=jax.ShapeDtypeStruct((B_pad, C_pad), out_dtype),
            grid_spec=pltpu.PrefetchScalarGridSpec(
                num_scalar_prefetch=0,
                grid=(num_b, num_k),
                in_specs=[
                    pl.BlockSpec((tile_b, tk), lambda i, k: (i, k)),   # x row tile
                    w_spec,                                            # weight chunk
                    pl.BlockSpec((1, C_pad), lambda i, k: (0, 0)),     # bias row
                ],
                out_specs=pl.BlockSpec((tile_b, C_pad), lambda i, k: (i, 0)),
                scratch_shapes=[pltpu.VMEM((tile_b, C_pad), jnp.float32)],
            ),
            compiler_params=pltpu.CompilerParams(
                dimension_semantics=("parallel", "arbitrary"),
                vmem_limit_bytes=vmem_limit,
            ),
            cost_estimate=cost,
        )(x, w, b)

    if single_w:
        try:
            out = run(1)   # constant weight block: single VMEM buffer (halves resident W)
        except Exception:
            out = run(2)   # fallback if pipeline_mode / Buffered(1) unsupported
    else:
        out = run(2)

    if trim:
        # Padded classes carry exactly-0 probability; consumers that can mask may
        # pass trim=False and skip this extra HBM copy of the output.
        out = out[:B, :C]
    return out


if __name__ == "__main__":
    key = jax.random.PRNGKey(0)
    kx, kw, kb = jax.random.split(key, 3)

    # Small shapes; classes intentionally NOT a multiple of 128 (lane padding path),
    # batch not a multiple of the default tile (batch padding + 2-tile megacore split).
    batch, hidden, classes = 48, 256, 100

    x = jax.random.normal(kx, (batch, hidden), dtype=jnp.float32)
    # Deterministic "module" parameters (synthetic Linear classifier init).
    w = jax.random.normal(kw, (hidden, classes), dtype=jnp.float32) * 0.05
    b = jax.random.normal(kb, (classes,), dtype=jnp.float32) * 0.1

    # One-time parameter preparation (hoisted out of the forward pass).
    params = prepare_linear_softmax_params(w, b)

    out = softmax_wrapper_forward(x, params)
    out = jax.block_until_ready(out)

    # Reference uses the same bf16-rounded MXU operands (f32 accumulation); softmax f32.
    xr = x.astype(jnp.bfloat16).astype(jnp.float32)
    wr = w.astype(jnp.bfloat16).astype(jnp.float32)
    ref = jax.nn.softmax(xr @ wr + b[None, :], axis=-1)

    assert out.shape == (batch, classes)
    err = float(jnp.max(jnp.abs(out - ref)))
    assert jnp.allclose(out, ref, atol=5e-3, rtol=5e-3), err
    # Exact normalization -> rows sum to 1 to f32 precision.
    assert jnp.allclose(jnp.sum(out, axis=-1), jnp.ones((batch,)), atol=1e-4)

    print("KERNEL_OK")
</pallas_src>

<mosaic_0001>
module attributes {stable_mosaic.version = 11 : i64} {
  func.func @_linear_softmax_kernel(%arg0: i32, %arg1: i32, %arg2: memref<32x256xf32, #tpu.memory_space<vmem>>, %arg3: memref<256x128xbf16, #tpu.memory_space<vmem>>, %arg4: memref<1x128xf32, #tpu.memory_space<vmem>>, %arg5: memref<32x128xf32, #tpu.memory_space<vmem>>, %arg6: memref<32x128xf32, #tpu.memory_space<vmem>>) attributes {dimension_semantics = [#tpu.dimension_semantics<parallel>, #tpu.dimension_semantics<arbitrary>], iteration_bounds = array<i64: 2, 1>, scalar_prefetch = 0 : i64, scratch_operands = 1 : i64, tpu.core_type = #tpu.core_type<tc>, window_params = [{transform_indices = @transform_0, window_bounds = array<i64: 32, 256>}, {pipeline_mode = #tpu.pipeline_mode<synchronous>, transform_indices = @transform_1, window_bounds = array<i64: 256, 128>}, {pipeline_mode = #tpu.pipeline_mode<synchronous>, transform_indices = @transform_2, window_bounds = array<i64: 1, 128>}, {transform_indices = @transform_3, window_bounds = array<i64: 32, 128>}]} {
    %c0_i32 = arith.constant 0 : i32
    %0 = arith.cmpi eq, %arg1, %c0_i32 : i32
    %1 = arith.extui %0 : i1 to i32
    %c0_i32_0 = arith.constant 0 : i32
    %2 = arith.cmpi ne, %1, %c0_i32_0 : i32
    scf.if %2 {
      %cst_10 = arith.constant 0.000000e+00 : f32
      %13 = vector.broadcast %cst_10 : f32 to vector<32x128xf32>
      %c0_11 = arith.constant 0 : index
      %c0_12 = arith.constant 0 : index
      %14 = vector.load %arg6[%c0_11, %c0_12] : memref<32x128xf32, #tpu.memory_space<vmem>>, vector<32x128xf32>
      tpu.vector_store %arg6[%c0_11, %c0_12], %13 {strides = array<i32>} : memref<32x128xf32, #tpu.memory_space<vmem>>, vector<32x128xf32>,
    } else {
    }
    %c0 = arith.constant 0 : index
    %c0_1 = arith.constant 0 : index
    %3 = vector.load %arg6[%c0, %c0_1] : memref<32x128xf32, #tpu.memory_space<vmem>>, vector<32x128xf32>
    %c0_2 = arith.constant 0 : index
    %c0_3 = arith.constant 0 : index
    %4 = vector.load %arg2[%c0_2, %c0_3] : memref<32x256xf32, #tpu.memory_space<vmem>>, vector<32x256xf32>
    %5 = arith.truncf %4 : vector<32x256xf32> to vector<32x256xbf16>
    %c0_4 = arith.constant 0 : index
    %c0_5 = arith.constant 0 : index
    %6 = vector.load %arg3[%c0_4, %c0_5] : memref<256x128xbf16, #tpu.memory_space<vmem>>, vector<256x128xbf16>
    %cst = arith.constant dense<0.000000e+00> : vector<32x128xf32>
    %7 = tpu.matmul %5, %6, %cst {dimension_numbers = #tpu.dot_dimension_numbers<[1], [0], [0], [1], [0, 0, 1, 1], [], []>} : vector<32x256xbf16>, vector<256x128xbf16>, vector<32x128xf32> -> vector<32x128xf32>
    %8 = arith.addf %3, %7 : vector<32x128xf32>
    %c0_6 = arith.constant 0 : index
    %c0_7 = arith.constant 0 : index
    %9 = vector.load %arg6[%c0_6, %c0_7] : memref<32x128xf32, #tpu.memory_space<vmem>>, vector<32x128xf32>
    tpu.vector_store %arg6[%c0_6, %c0_7], %8 {strides = array<i32>} : memref<32x128xf32, #tpu.memory_space<vmem>>, vector<32x128xf32>,
    %c0_i32_8 = arith.constant 0 : i32
    %10 = arith.cmpi eq, %arg1, %c0_i32_8 : i32
    %11 = arith.extui %10 : i1 to i32
    %c0_i32_9 = arith.constant 0 : i32
    %12 = arith.cmpi ne, %11, %c0_i32_9 : i32
    scf.if %12 {
      %c0_10 = arith.constant 0 : index
      %c0_11 = arith.constant 0 : index
      %13 = vector.load %arg6[%c0_10, %c0_11] : memref<32x128xf32, #tpu.memory_space<vmem>>, vector<32x128xf32>
      %c0_12 = arith.constant 0 : index
      %c0_13 = arith.constant 0 : index
      %14 = vector.load %arg4[%c0_12, %c0_13] : memref<1x128xf32, #tpu.memory_space<vmem>>, vector<1x128xf32>
      %15 = vector.broadcast %14 : vector<1x128xf32> to vector<32x128xf32>
      %16 = arith.addf %13, %15 : vector<32x128xf32>
      %cst_14 = arith.constant dense<0xFF800000> : vector<32xf32>
      %17 = vector.multi_reduction <maximumf>, %16, %cst_14 [1] : vector<32x128xf32> to vector<32xf32>
      %18 = vector.shape_cast %17 : vector<32xf32> to vector<32x1xf32>
      %19 = vector.broadcast %18 : vector<32x1xf32> to vector<32x128xf32>
      %20 = arith.subf %16, %19 : vector<32x128xf32>
      %21 = math.exp %20 : vector<32x128xf32>
      %cst_15 = arith.constant dense<0.000000e+00> : vector<32xf32>
      %22 = vector.multi_reduction <add>, %21, %cst_15 [1] : vector<32x128xf32> to vector<32xf32>
      %23 = vector.shape_cast %22 : vector<32xf32> to vector<32x1xf32>
      %24 = vector.broadcast %23 : vector<32x1xf32> to vector<32x128xf32>
      %25 = arith.divf %21, %24 : vector<32x128xf32>
      %c0_16 = arith.constant 0 : index
      %c0_17 = arith.constant 0 : index
      %26 = vector.load %arg5[%c0_16, %c0_17] : memref<32x128xf32, #tpu.memory_space<vmem>>, vector<32x128xf32>
      tpu.vector_store %arg5[%c0_16, %c0_17], %25 {strides = array<i32>} : memref<32x128xf32, #tpu.memory_space<vmem>>, vector<32x128xf32>,
    } else {
    }
    return
  }
  func.func @transform_0(%arg0: i32, %arg1: i32) -> (i32, i32) {
    %c0_i32 = arith.constant 0 : i32
    return %arg0, %arg1 : i32, i32
  }
  func.func @transform_1(%arg0: i32, %arg1: i32) -> (i32, i32) {
    %c0_i32 = arith.constant 0 : i32
    %c0_i32_0 = arith.constant 0 : i32
    return %arg1, %c0_i32 : i32, i32
  }
  func.func @transform_2(%arg0: i32, %arg1: i32) -> (i32, i32) {
    %c0_i32 = arith.constant 0 : i32
    %c0_i32_0 = arith.constant 0 : i32
    %c0_i32_1 = arith.constant 0 : i32
    return %c0_i32, %c0_i32_0 : i32, i32
  }
  func.func @transform_3(%arg0: i32, %arg1: i32) -> (i32, i32) {
    %c0_i32 = arith.constant 0 : i32
    %c0_i32_0 = arith.constant 0 : i32
    return %arg0, %c0_i32 : i32, i32
  }
}

module attributes {stable_mosaic.version = 11 : i64} {
  func.func @_linear_softmax_kernel(%arg0: i32, %arg1: i32, %arg2: memref<32x256xf32, #tpu.memory_space<vmem>>, %arg3: memref<256x128xbf16, #tpu.memory_space<vmem>>, %arg4: memref<1x128xf32, #tpu.memory_space<vmem>>, %arg5: memref<32x128xf32, #tpu.memory_space<vmem>>, %arg6: memref<32x128xf32, #tpu.memory_space<vmem>>) attributes {dimension_semantics = [#tpu.dimension_semantics<parallel>, #tpu.dimension_semantics<arbitrary>], iteration_bounds = array<i64: 2, 1>, scalar_prefetch = 0 : i64, scratch_operands = 1 : i64, tpu.core_type = #tpu.core_type<tc>, window_params = [{transform_indices = @transform_0, window_bounds = array<i64: 32, 256>}, {transform_indices = @transform_1, window_bounds = array<i64: 256, 128>}, {pipeline_mode = #tpu.pipeline_mode<synchronous>, transform_indices = @transform_2, window_bounds = array<i64: 1, 128>}, {transform_indices = @transform_3, window_bounds = array<i64: 32, 128>}]} {
    %c0_i32 = arith.constant 0 : i32
    %0 = arith.cmpi eq, %arg1, %c0_i32 : i32
    %1 = arith.extui %0 : i1 to i32
    %c0_i32_0 = arith.constant 0 : i32
    %2 = arith.cmpi ne, %1, %c0_i32_0 : i32
    scf.if %2 {
      %cst_10 = arith.constant 0.000000e+00 : f32
      %13 = vector.broadcast %cst_10 : f32 to vector<32x128xf32>
      %c0_11 = arith.constant 0 : index
      %c0_12 = arith.constant 0 : index
      %14 = vector.load %arg6[%c0_11, %c0_12] : memref<32x128xf32, #tpu.memory_space<vmem>>, vector<32x128xf32>
      tpu.vector_store %arg6[%c0_11, %c0_12], %13 {strides = array<i32>} : memref<32x128xf32, #tpu.memory_space<vmem>>, vector<32x128xf32>,
    } else {
    }
    %c0 = arith.constant 0 : index
    %c0_1 = arith.constant 0 : index
    %3 = vector.load %arg6[%c0, %c0_1] : memref<32x128xf32, #tpu.memory_space<vmem>>, vector<32x128xf32>
    %c0_2 = arith.constant 0 : index
    %c0_3 = arith.constant 0 : index
    %4 = vector.load %arg2[%c0_2, %c0_3] : memref<32x256xf32, #tpu.memory_space<vmem>>, vector<32x256xf32>
    %5 = arith.truncf %4 : vector<32x256xf32> to vector<32x256xbf16>
    %c0_4 = arith.constant 0 : index
    %c0_5 = arith.constant 0 : index
    %6 = vector.load %arg3[%c0_4, %c0_5] : memref<256x128xbf16, #tpu.memory_space<vmem>>, vector<256x128xbf16>
    %cst = arith.constant dense<0.000000e+00> : vector<32x128xf32>
    %7 = tpu.matmul %5, %6, %cst {dimension_numbers = #tpu.dot_dimension_numbers<[1], [0], [0], [1], [0, 0, 1, 1], [], []>} : vector<32x256xbf16>, vector<256x128xbf16>, vector<32x128xf32> -> vector<32x128xf32>
    %8 = arith.addf %3, %7 : vector<32x128xf32>
    %c0_6 = arith.constant 0 : index
    %c0_7 = arith.constant 0 : index
    %9 = vector.load %arg6[%c0_6, %c0_7] : memref<32x128xf32, #tpu.memory_space<vmem>>, vector<32x128xf32>
    tpu.vector_store %arg6[%c0_6, %c0_7], %8 {strides = array<i32>} : memref<32x128xf32, #tpu.memory_space<vmem>>, vector<32x128xf32>,
    %c0_i32_8 = arith.constant 0 : i32
    %10 = arith.cmpi eq, %arg1, %c0_i32_8 : i32
    %11 = arith.extui %10 : i1 to i32
    %c0_i32_9 = arith.constant 0 : i32
    %12 = arith.cmpi ne, %11, %c0_i32_9 : i32
    scf.if %12 {
      %c0_10 = arith.constant 0 : index
      %c0_11 = arith.constant 0 : index
      %13 = vector.load %arg6[%c0_10, %c0_11] : memref<32x128xf32, #tpu.memory_space<vmem>>, vector<32x128xf32>
      %c0_12 = arith.constant 0 : index
      %c0_13 = arith.constant 0 : index
      %14 = vector.load %arg4[%c0_12, %c0_13] : memref<1x128xf32, #tpu.memory_space<vmem>>, vector<1x128xf32>
      %15 = vector.broadcast %14 : vector<1x128xf32> to vector<32x128xf32>
      %16 = arith.addf %13, %15 : vector<32x128xf32>
      %cst_14 = arith.constant dense<0xFF800000> : vector<32xf32>
      %17 = vector.multi_reduction <maximumf>, %16, %cst_14 [1] : vector<32x128xf32> to vector<32xf32>
      %18 = vector.shape_cast %17 : vector<32xf32> to vector<32x1xf32>
      %19 = vector.broadcast %18 : vector<32x1xf32> to vector<32x128xf32>
      %20 = arith.subf %16, %19 : vector<32x128xf32>
      %21 = math.exp %20 : vector<32x128xf32>
      %cst_15 = arith.constant dense<0.000000e+00> : vector<32xf32>
      %22 = vector.multi_reduction <add>, %21, %cst_15 [1] : vector<32x128xf32> to vector<32xf32>
      %23 = vector.shape_cast %22 : vector<32xf32> to vector<32x1xf32>
      %24 = vector.broadcast %23 : vector<32x1xf32> to vector<32x128xf32>
      %25 = arith.divf %21, %24 : vector<32x128xf32>
      %c0_16 = arith.constant 0 : index
      %c0_17 = arith.constant 0 : index
      %26 = vector.load %arg5[%c0_16, %c0_17] : memref<32x128xf32, #tpu.memory_space<vmem>>, vector<32x128xf32>
      tpu.vector_store %arg5[%c0_16, %c0_17], %25 {strides = array<i32>} : memref<32x128xf32, #tpu.memory_space<vmem>>, vector<32x128xf32>,
    } else {
    }
    return
  }
  func.func @transform_0(%arg0: i32, %arg1: i32) -> (i32, i32) {
    %c0_i32 = arith.constant 0 : i32
    return %arg0, %arg1 : i32, i32
  }
  func.func @transform_1(%arg0: i32, %arg1: i32) -> (i32, i32) {
    %c0_i32 = arith.constant 0 : i32
    %c0_i32_0 = arith.constant 0 : i32
    return %arg1, %c0_i32 : i32, i32
  }
  func.func @transform_2(%arg0: i32, %arg1: i32) -> (i32, i32) {
    %c0_i32 = arith.constant 0 : i32
    %c0_i32_0 = arith.constant 0 : i32
    %c0_i32_1 = arith.constant 0 : i32
    return %c0_i32, %c0_i32_0 : i32, i32
  }
  func.func @transform_3(%arg0: i32, %arg1: i32) -> (i32, i32) {
    %c0_i32 = arith.constant 0 : i32
    %c0_i32_0 = arith.constant 0 : i32
    return %arg0, %c0_i32 : i32, i32
  }
}

</mosaic_0001>

<llo_original>
// kernel: tpu_custom_call.1
$region0: #{tpu_custom_call.1}
  #allocation0 [shape = 'u32[]', space=smem, size = 0x4, offset = 0x4, fixed_abs, tag = 'smem constant byte address 0x4 - core index']
  #allocation1 [shape = 'u32[144,128]{1,0:T(1,128)}', space=vmem, size = 0x12000, scoped, tag = 'internal scratch']
  #allocation2 [shape = 'f32[32,128]{1,0:T(8,128)}', space=vmem, size = 0x4000, scoped, tag = 'scratch operand']
  %s0 = inlined_call_operand.hbm [shape: f32[64,256], index: 0, kind: input, shape index: {}]
  %s1 = inlined_call_operand.hbm [shape: bf16[256,128], index: 1, kind: input, shape index: {}]
  %s2 = inlined_call_operand.vmem [shape: f32[1,128], index: 2, kind: input, shape index: {}]
  %s3 = inlined_call_operand.hbm [shape: f32[64,128], index: 3, kind: output, shape index: {}]
  %s4 = sld [smem:[#allocation0]]
  $region61: #{tpu_custom_call.1} parent=0
    _
  %s6 = ssub.s32 1, %s4
  %s7 = scalar_select 0, %s6, %s4
  $region1: #{tpu_custom_call.1} parent=0
    #allocation3 [shape = 'u8[65536]{0}', space=vmem, size = 0x10000, scoped, tag = 'input window, operand 0']
    #allocation4 [shape = 's32[2]{0}', space=sflag, size = 0x8, scoped, tag = 'scoped memory for tpu_custom_call.1']
    #allocation5 [shape = 's32[2]{0}', space=sflag, size = 0x8, scoped, tag = 'scoped memory for tpu_custom_call.1']
    #allocation6 [shape = 'u8[65536]{0}', space=vmem, size = 0x10000, scoped, tag = 'input window, operand 1, single buffered']
    #allocation7 [shape = 's32[1]{0}', space=sflag, size = 0x4, scoped, tag = 'scoped memory for tpu_custom_call.1']
    #allocation8 [shape = 'u8[32768]{0}', space=vmem, size = 0x8000, scoped, tag = 'output window, operand 0']
    %8 = vsyncpa [#allocation4], 0
    %s9 = scalar_lea.sflag [#allocation4], 1
    %10 = vsyncpa %s9, 0
    %11 = vsyncpa [#allocation7], 0
    %12 = vsyncpa [#allocation5], 0
    %s13 = scalar_lea.sflag [#allocation5], 1
    %14 = vsyncpa %s13, 0
    loop: start=0, step=1, limit=4
    $region2: #{tpu_custom_call.1} parent=1 // loop_pre_header
      _
    $region3: #{tpu_custom_call.1} parent=1 // loop_header
      %s16 = sphi 0, %s20
      %p17 = scmp.ge.s32.totalorder %s16, 4
      %s23 = sphi 0, %s35
      %s24 = sphi 0, %s31
      %s25 = sphi 0, %s23
      %s26 = sphi 0, %s24
      %s27 = sphi 0, %s25
      %s28 = sphi 0, %s26
      %s40 = sphi 0, %s42
      %s43 = sphi 0, %s40
      %s44 = sphi 0, %s43
      %s60 = sphi 0, %s44
      %s66 = sphi 0, %s68
      %s69 = sphi 0, %s66
      %s70 = sphi 0, %s69
      %s86 = sphi 0, %s70
      %s90 = sphi 0, %s90
      %s92 = sphi 0, %s90
      %s93 = sphi 0, %s92
      %s107 = sphi 0, %s93
      %s113 = sphi 0, %s115
      %s116 = sphi 0, %s113
      %s117 = sphi 0, %s116
      %s133 = sphi 0, %s117
    $region4: #{tpu_custom_call.1} parent=1 // loop_header_branch
      %19 = sbr.rel (%p17) target = $region8
    $region5: #{tpu_custom_call.1} parent=1 // loop_body
      %s21 = ssub.s32 %s16, 1
      %s22 = ssub.s32 %s16, 2
      %s29 = sadd.s32 1, %s24
      %p30 = scmp.ge.s32.totalorder %s29, 1
      %s31 = scalar_select %p30, 0, %s29
      %s32 = sadd.s32 1, %s23
      %s33 = scalar_select %p30, %s32, %s23
      %p34 = scmp.ge.s32.totalorder %s33, 2
      %s35 = scalar_select %p34, 0, %s33
      %s36 = ssub.s32 %s23, %s35
      %s37 = ssub.s32 %s24, %s31
      %s38 = sor.u32 %s36, %s37
      %p39 = scmp.eq.s32.totalorder %s38, 0
      %s41 = sadd.s32 %s40, 1
      %s42 = scalar_select %p39, %s40, %s41
      %p45 = pneg %p39
      %p46 = scmp.eq.s32.totalorder %s16, 1
      %p47 = por %p45, %p46
      %p48 = scmp.ne.s32.totalorder %s40, %s43
      %p49 = scmp.eq.s32.totalorder %s16, 0
      %p50 = por %p48, %p49
      %p51 = scmp.ne.s32.totalorder %s40, %s43
      %p52 = scmp.eq.s32.totalorder %s21, 1
      %p53 = por %p51, %p52
      %p54 = scmp.ne.s32.totalorder %s43, %s44
      %p55 = scmp.eq.s32.totalorder %s21, 0
      %p56 = por %p54, %p55
      %p57 = scmp.ne.s32.totalorder %s43, %s44
      %p58 = scmp.eq.s32.totalorder %s22, 1
      %p59 = por %p57, %p58
      %p61 = scmp.ne.s32.totalorder %s44, %s60
      %p62 = scmp.eq.s32.totalorder %s22, 0
      %p63 = por %p61, %p62
      %s64 = ssub.s32 %s24, %s31
      %p65 = scmp.eq.s32.totalorder %s64, 0
      %s67 = sadd.s32 %s66, 1
      %s68 = scalar_select %p65, %s66, %s67
      %p71 = pneg %p65
      %p72 = scmp.eq.s32.totalorder %s16, 1
      %p73 = por %p71, %p72
      %p74 = scmp.ne.s32.totalorder %s66, %s69
      %p75 = scmp.eq.s32.totalorder %s16, 0
      %p76 = por %p74, %p75
      %p77 = scmp.ne.s32.totalorder %s66, %s69
      %p78 = scmp.eq.s32.totalorder %s21, 1
      %p79 = por %p77, %p78
      %p80 = scmp.ne.s32.totalorder %s69, %s70
      %p81 = scmp.eq.s32.totalorder %s21, 0
      %p82 = por %p80, %p81
      %p83 = scmp.ne.s32.totalorder %s69, %s70
      %p84 = scmp.eq.s32.totalorder %s22, 1
      %p85 = por %p83, %p84
      %p87 = scmp.ne.s32.totalorder %s70, %s86
      %p88 = scmp.eq.s32.totalorder %s22, 0
      %p89 = por %p87, %p88
      %s91 = sadd.s32 %s90, 1
      %p94 = scmp.eq.s32.totalorder %s16, 1
      %p95 = scmp.ne.s32.totalorder %s90, %s92
      %p96 = scmp.eq.s32.totalorder %s16, 0
      %p97 = por %p95, %p96
      %p98 = scmp.ne.s32.totalorder %s90, %s92
      %p99 = scmp.eq.s32.totalorder %s21, 1
      %p100 = por %p98, %p99
      %p101 = scmp.ne.s32.totalorder %s92, %s93
      %p102 = scmp.eq.s32.totalorder %s21, 0
      %p103 = por %p101, %p102
      %p104 = scmp.ne.s32.totalorder %s92, %s93
      %p105 = scmp.eq.s32.totalorder %s22, 1
      %p106 = por %p104, %p105
      %p108 = scmp.ne.s32.totalorder %s93, %s107
      %p109 = scmp.eq.s32.totalorder %s22, 0
      %p110 = por %p108, %p109
      %s111 = ssub.s32 %s23, %s35
      %p112 = scmp.eq.s32.totalorder %s111, 0
      %s114 = sadd.s32 %s113, 1
      %s115 = scalar_select %p112, %s113, %s114
      %p118 = pneg %p112
      %p119 = scmp.eq.s32.totalorder %s16, 1
      %p120 = por %p118, %p119
      %p121 = scmp.ne.s32.totalorder %s113, %s116
      %p122 = scmp.eq.s32.totalorder %s16, 0
      %p123 = por %p121, %p122
      %p124 = scmp.ne.s32.totalorder %s113, %s116
      %p125 = scmp.eq.s32.totalorder %s21, 1
      %p126 = por %p124, %p125
      %p127 = scmp.ne.s32.totalorder %s116, %s117
      %p128 = scmp.eq.s32.totalorder %s21, 0
      %p129 = por %p127, %p128
      %p130 = scmp.ne.s32.totalorder %s116, %s117
      %p131 = scmp.eq.s32.totalorder %s22, 1
      %p132 = por %p130, %p131
      %p134 = scmp.ne.s32.totalorder %s117, %s133
      %p135 = scmp.eq.s32.totalorder %s22, 0
      %p136 = por %p134, %p135
      %p137 = scmp.le.s32.totalorder 1, %s16
      %p138 = scmp.lt.s32.totalorder %s16, 3
      %p139 = pnand %p137, %p138
      %p140 = pneg %p139
      // Predicated region
      $region9: #{tpu_custom_call.1} parent=5 // pred_check
        _
      $region10: #{tpu_custom_call.1} parent=5 // pred_check_branch
        %142 = sbr.rel (%p139) target = $region12
      $region11: #{tpu_custom_call.1} parent=5 // pred_region
        %s143 = ssub.s32 %s16, 1
        // Predicated region
        $region13: #{tpu_custom_call.1} parent=11 // pred_check
          %p144 = pneg %p82
        $region14: #{tpu_custom_call.1} parent=11 // pred_check_branch
          %146 = sbr.rel (%p144) target = $region16
        $region15: #{tpu_custom_call.1} parent=11 // pred_region
          %s147 = smul.u32 32, %s26
          %s149 = ssub.s32 2048, 2048
          %150 = vsyncadd [#allocation7], %s149
          %s151 = smul.addr %s147, 64
          %s152 = scalar_lea.hbm %s1, %s151
          %s153 = sshll.u32 [#allocation6], 4
          %s154 = int_to_ptr.vmem [resolvable:$true] %s153
          %159 = dma.hbm_to_vmem [thread:$0]  %s152, 2048, %s154, [#allocation7], 64, 64, 4
        $region16: #{tpu_custom_call.1} parent=11 // pred_fallthru
          _
        // Predicated region
        $region17: #{tpu_custom_call.1} parent=11 // pred_check
          %p160 = pneg %p103
        $region18: #{tpu_custom_call.1} parent=11 // pred_check_branch
          %162 = sbr.rel (%p160) target = $region20
        $region19: #{tpu_custom_call.1} parent=11 // pred_region
          _
        $region20: #{tpu_custom_call.1} parent=11 // pred_fallthru
          _
      $region12: #{tpu_custom_call.1} parent=5 // pred_fallthru
        _
      %p163 = scmp.lt.s32.totalorder %s16, 2
      // Predicated region
      $region21: #{tpu_custom_call.1} parent=5 // pred_check
        %p164 = pneg %p163
      $region22: #{tpu_custom_call.1} parent=5 // pred_check_branch
        %166 = sbr.rel (%p164) target = $region24
      $region23: #{tpu_custom_call.1} parent=5 // pred_region
        // Predicated region
        $region25: #{tpu_custom_call.1} parent=23 // pred_check
          %p167 = pneg %p50
        $region26: #{tpu_custom_call.1} parent=23 // pred_check_branch
          %169 = sbr.rel (%p167) target = $region28
        $region27: #{tpu_custom_call.1} parent=23 // pred_region
          %s170 = sand.u32 %s40, 1
          %s171 = scalar_lea.sflag [#allocation4], %s170
          %s172 = sand.u32 %s40, 1
          %s173 = smul.addr %s172, 64
          %s174 = scalar_lea.vmem [#allocation3], %s173
          %s175 = smul.u32 4, %s23
          %s176 = smul.u32 2, %s24
          %s178 = ssub.s32 1024, 1024
          %179 = vsyncadd %s171, %s178
          %s180 = smul.addr %s175, 2
          %s181 = sadd.s32 %s176, %s180
          %s182 = smul.addr %s181, 128
          %s183 = scalar_lea.hbm %s0, %s182
          %s184 = sshll.u32 %s174, 4
          %s185 = int_to_ptr.vmem [resolvable:$true] %s184
          %190 = dma.hbm_to_vmem [thread:$0]  %s183, 1024, %s185, %s171, 256, 256, 16
        $region28: #{tpu_custom_call.1} parent=23 // pred_fallthru
          _
      $region24: #{tpu_custom_call.1} parent=5 // pred_fallthru
        _
      %p191 = scmp.le.s32.totalorder 1, %s16
      %p192 = scmp.lt.s32.totalorder %s16, 3
      %p193 = pnand %p191, %p192
      %p194 = pneg %p193
      // Predicated region
      $region29: #{tpu_custom_call.1} parent=5 // pred_check
        _
      $region30: #{tpu_custom_call.1} parent=5 // pred_check_branch
        %196 = sbr.rel (%p193) target = $region32
      $region31: #{tpu_custom_call.1} parent=5 // pred_region
        %s197 = ssub.s32 %s16, 1
        %s198 = sand.u32 %s43, 1
        %s199 = scalar_lea.sflag [#allocation4], %s198
        %s200 = sand.u32 %s43, 1
        %s201 = smul.addr %s200, 64
        %s202 = scalar_lea.vmem [#allocation3], %s201
        // Predicated region
        $region33: #{tpu_custom_call.1} parent=31 // pred_check
          %p203 = pneg %p56
        $region34: #{tpu_custom_call.1} parent=31 // pred_check_branch
          %205 = sbr.rel (%p203) target = $region36
        $region35: #{tpu_custom_call.1} parent=31 // pred_region
          %206 = dma.done %s199, 1024
        $region36: #{tpu_custom_call.1} parent=31 // pred_fallthru
          _
        // Predicated region
        $region37: #{tpu_custom_call.1} parent=31 // pred_check
          %p207 = pneg %p82
        $region38: #{tpu_custom_call.1} parent=31 // pred_check_branch
          %209 = sbr.rel (%p207) target = $region40
        $region39: #{tpu_custom_call.1} parent=31 // pred_region
          %210 = dma.done [#allocation7], 2048
        $region40: #{tpu_custom_call.1} parent=31 // pred_fallthru
          _
        %s211 = sand.u32 %s43, 1
        %s212 = scalar_lea.sflag [#allocation4], %s211
        %s213 = sand.u32 %s43, 1
        %s214 = smul.addr %s213, 64
        %s215 = scalar_lea.vmem [#allocation3], %s214
        %p216 = pneg %p56
        %p217 = pneg %p53
        %p218 = pneg %p82
        %p219 = pneg %p79
        %p220 = pneg %p103
        %p221 = pneg %p100
        %p222 = pneg %p129
        %p223 = pneg %p126
        %s224 = sand.u32 %s116, 1
        %s225 = scalar_lea.sflag [#allocation5], %s224
        %s226 = sand.u32 %s116, 1
        %s227 = smul.addr %s226, 32
        %s228 = scalar_lea.vmem [#allocation8], %s227
        %s229 = smul.u32 4, %s25
        %s230 = smul.u32 2, %s26
        %s231 = smul.u32 32, %s26
        %s232 = smul.u32 4, %s25
        %p234 = scmp.eq.s32.totalorder %s26, 0
        // Predicated region
        $region41: #{tpu_custom_call.1} parent=31 // pred_check
          %p235 = pneg %p234
        $region42: #{tpu_custom_call.1} parent=31 // pred_check_branch
          %237 = sbr.rel (%p235) target = $region44
        $region43: #{tpu_custom_call.1} parent=31 // pred_region
          %238 = vst [vmem:[#allocation2] sm:$0xff] 0.0
          %239 = vst [vmem:[#allocation2 + $0x8] sm:$0xff] 0.0
          %240 = vst [vmem:[#allocation2 + $0x10] sm:$0xff] 0.0
          %241 = vst [vmem:[#allocation2 + $0x18] sm:$0xff] 0.0
        $region44: #{tpu_custom_call.1} parent=31 // pred_fallthru
          _
        %v242 = vld [vmem:[#allocation2] sm:$0xff]
        %v243 = vld [vmem:[#allocation2 + $0x8] sm:$0xff]
        %v244 = vld [vmem:[#allocation2 + $0x10] sm:$0xff]
        %v245 = vld [vmem:[#allocation2 + $0x18] sm:$0xff]
        %v246 = vld [vmem:[%s202] sm:$0xff]
        %v247 = vld [vmem:[%s202 + $0x8] sm:$0xff]
        %v248 = vld [vmem:[%s202 + $0x10] sm:$0xff]
        %v249 = vld [vmem:[%s202 + $0x18] sm:$0xff]
        %v250 = vld [vmem:[%s202 + $0x20] sm:$0xff]
        %v251 = vld [vmem:[%s202 + $0x28] sm:$0xff]
        %v252 = vld [vmem:[%s202 + $0x30] sm:$0xff]
        %v253 = vld [vmem:[%s202 + $0x38] sm:$0xff]
        %v254 = vpack.c.bf16 %v248, %v246
        %v255 = vpack.c.bf16 %v249, %v247
        %v256 = vpack.c.bf16 %v252, %v250
        %v257 = vpack.c.bf16 %v253, %v251
        %v258 = vld [vmem:[#allocation6] sm:$0xf]
        %v259 = vld [vmem:[#allocation6 + $0x4] sm:$0xf]
        %v260 = vld [vmem:[#allocation6 + $0x8] sm:$0xf]
        %v261 = vld [vmem:[#allocation6 + $0xc] sm:$0xf]
        %v262 = vld [vmem:[#allocation6 + $0x10] sm:$0xf]
        %v263 = vld [vmem:[#allocation6 + $0x14] sm:$0xf]
        %v264 = vld [vmem:[#allocation6 + $0x18] sm:$0xf]
        %v265 = vld [vmem:[#allocation6 + $0x1c] sm:$0xf]
        %v266 = vld [vmem:[#allocation6 + $0x20] sm:$0xf]
        %v267 = vld [vmem:[#allocation6 + $0x24] sm:$0xf]
        %v268 = vld [vmem:[#allocation6 + $0x28] sm:$0xf]
        %v269 = vld [vmem:[#allocation6 + $0x2c] sm:$0xf]
        %v270 = vld [vmem:[#allocation6 + $0x30] sm:$0xf]
        %v271 = vld [vmem:[#allocation6 + $0x34] sm:$0xf]
        %v272 = vld [vmem:[#allocation6 + $0x38] sm:$0xf]
        %v273 = vld [vmem:[#allocation6 + $0x3c] sm:$0xf]
        %v274 = vld [vmem:[#allocation6 + $0x40] sm:$0xf]
        %v275 = vld [vmem:[#allocation6 + $0x44] sm:$0xf]
        %v276 = vld [vmem:[#allocation6 + $0x48] sm:$0xf]
        %v277 = vld [vmem:[#allocation6 + $0x4c] sm:$0xf]
        %v278 = vld [vmem:[#allocation6 + $0x50] sm:$0xf]
        %v279 = vld [vmem:[#allocation6 + $0x54] sm:$0xf]
        %v280 = vld [vmem:[#allocation6 + $0x58] sm:$0xf]
        %v281 = vld [vmem:[#allocation6 + $0x5c] sm:$0xf]
        %v282 = vld [vmem:[#allocation6 + $0x60] sm:$0xf]
        %v283 = vld [vmem:[#allocation6 + $0x64] sm:$0xf]
        %v284 = vld [vmem:[#allocation6 + $0x68] sm:$0xf]
        %v285 = vld [vmem:[#allocation6 + $0x6c] sm:$0xf]
        %v286 = vld [vmem:[#allocation6 + $0x70] sm:$0xf]
        %v287 = vld [vmem:[#allocation6 + $0x74] sm:$0xf]
        %v288 = vld [vmem:[#allocation6 + $0x78] sm:$0xf]
        %v289 = vld [vmem:[#allocation6 + $0x7c] sm:$0xf]
        %v322 = vunpack.c.l.b16 %v258
        %v323 = vunpack.c.l.b16 %v259
        %v324 = vunpack.c.l.b16 %v260
        %v325 = vunpack.c.l.b16 %v261
        %v326 = vunpack.c.l.b16 %v262
        %v327 = vunpack.c.l.b16 %v263
        %v328 = vunpack.c.l.b16 %v264
        %v329 = vunpack.c.l.b16 %v265
        %v330 = vunpack.c.l.b16 %v266
        %v331 = vunpack.c.l.b16 %v267
        %v332 = vunpack.c.l.b16 %v268
        %v333 = vunpack.c.l.b16 %v269
        %v334 = vunpack.c.l.b16 %v270
        %v335 = vunpack.c.l.b16 %v271
        %v336 = vunpack.c.l.b16 %v272
        %v337 = vunpack.c.l.b16 %v273
        %v338 = vunpack.c.l.b16 %v274
        %v339 = vunpack.c.l.b16 %v275
        %v340 = vunpack.c.l.b16 %v276
        %v341 = vunpack.c.l.b16 %v277
        %v342 = vunpack.c.l.b16 %v278
        %v343 = vunpack.c.l.b16 %v279
        %v344 = vunpack.c.l.b16 %v280
        %v345 = vunpack.c.l.b16 %v281
        %v346 = vunpack.c.l.b16 %v282
        %v347 = vunpack.c.l.b16 %v283
        %v348 = vunpack.c.l.b16 %v284
        %v349 = vunpack.c.l.b16 %v285
        %v350 = vunpack.c.l.b16 %v286
        %v351 = vunpack.c.l.b16 %v287
        %v352 = vunpack.c.l.b16 %v288
        %v353 = vunpack.c.l.b16 %v289
        %v354 = vpack.c.b16 %v323, %v322
        %v355 = vpack.c.b16 %v325, %v324
        %v356 = vpack.c.b16 %v327, %v326
        %v357 = vpack.c.b16 %v329, %v328
        %v358 = vpack.c.b16 %v331, %v330
        %v359 = vpack.c.b16 %v333, %v332
        %v360 = vpack.c.b16 %v335, %v334
        %v361 = vpack.c.b16 %v337, %v336
        %v362 = vpack.c.b16 %v339, %v338
        %v363 = vpack.c.b16 %v341, %v340
        %v364 = vpack.c.b16 %v343, %v342
        %v365 = vpack.c.b16 %v345, %v344
        %v366 = vpack.c.b16 %v347, %v346
        %v367 = vpack.c.b16 %v349, %v348
        %v368 = vpack.c.b16 %v351, %v350
        %v369 = vpack.c.b16 %v353, %v352
        %386 = vmatprep.subr.bf16.mxu0 0
        %387 = vmatpush1.bf16.msra.mxu0 %v361
        %388 = vmatprep.subr.bf16.mxu0 0
        %389 = vmatpush1.bf16.msra.mxu0 %v360
        %390 = vmatprep.subr.bf16.mxu0 0
        %391 = vmatpush1.bf16.msra.mxu0 %v359
        %392 = vmatprep.subr.bf16.mxu0 0
        %393 = vmatpush1.bf16.msra.mxu0 %v358
        %394 = vmatprep.subr.bf16.mxu0 0
        %395 = vmatpush1.bf16.msra.mxu0 %v357
        %396 = vmatprep.subr.bf16.mxu0 0
        %397 = vmatpush1.bf16.msra.mxu0 %v356
        %398 = vmatprep.subr.bf16.mxu0 0
        %399 = vmatpush1.bf16.msra.mxu0 %v355
        %400 = vmatprep.subr.bf16.mxu0 0
        %401 = vmatpush1.bf16.msra.mxu0 %v354
        %402 = vmatprep.subr.bf16.mxu0 0
        %403 = vmatpush2.bf16.msra.mxu0 %v369
        %404 = vmatprep.subr.bf16.mxu0 0
        %405 = vmatpush2.bf16.msra.mxu0 %v368
        %406 = vmatprep.subr.bf16.mxu0 0
        %407 = vmatpush2.bf16.msra.mxu0 %v367
        %408 = vmatprep.subr.bf16.mxu0 0
        %409 = vmatpush2.bf16.msra.mxu0 %v366
        %410 = vmatprep.subr.bf16.mxu0 0
        %411 = vmatpush2.bf16.msra.mxu0 %v365
        %412 = vmatprep.subr.bf16.mxu0 0
        %413 = vmatpush2.bf16.msra.mxu0 %v364
        %414 = vmatprep.subr.bf16.mxu0 0
        %415 = vmatpush2.bf16.msra.mxu0 %v363
        %416 = vmatprep.subr.bf16.mxu0 0
        %417 = vmatpush2.bf16.msra.mxu0 %v362
        %418 = vmatprep.mubr.bf16.mxu0 %v255
        %419 = vmatmul.mubr.bf16.gmra.mxu0 %v254
        %v420 = vpop.f32.mrf.mxu0
        %v421 = vadd.f32 0.0, %v420
        %v422 = vpop.f32.mrf.mxu0
        %v423 = vpop.f32.mrf.mxu0
        %v424 = vadd.f32 0.0, %v423
        %v425 = vpop.f32.mrf.mxu0
        %426 = vmatprep.mubr.bf16.mxu0 %v257
        %427 = vmatmul.mubr.bf16.gmra.mxu0 %v256
        %v428 = vpop.f32.mrf.mxu0
        %v429 = vadd.f32 0.0, %v428
        %v430 = vpop.f32.mrf.mxu0
        %v431 = vpop.f32.mrf.mxu0
        %v432 = vadd.f32 0.0, %v431
        %v433 = vpop.f32.mrf.mxu0
        %434 = vdwg.mxu0
        %v435 = vadd.f32 %v242, %v421
        %v436 = vadd.f32 %v243, %v424
        %v437 = vadd.f32 %v244, %v429
        %v438 = vadd.f32 %v245, %v432
        %439 = vst [vmem:[#allocation2] sm:$0xff] %v435
        %440 = vst [vmem:[#allocation2 + $0x8] sm:$0xff] %v436
        %441 = vst [vmem:[#allocation2 + $0x10] sm:$0xff] %v437
        %442 = vst [vmem:[#allocation2 + $0x18] sm:$0xff] %v438
        // Predicated region
        $region45: #{tpu_custom_call.1} parent=31 // pred_check
          %p443 = pneg %p234
        $region46: #{tpu_custom_call.1} parent=31 // pred_check_branch
          %445 = sbr.rel (%p443) target = $region48
        $region47: #{tpu_custom_call.1} parent=31 // pred_region
          %v446 = vld [vmem:[#allocation2] sm:$0xff]
          %v447 = vld [vmem:[#allocation2 + $0x8] sm:$0xff]
          %v448 = vld [vmem:[#allocation2 + $0x10] sm:$0xff]
          %v449 = vld [vmem:[#allocation2 + $0x18] sm:$0xff]
          %v450 = vld [vmem:[%s2] sm:$0x1]
          %v452 = vlaneseq
          %v453 = vshrl.u32 %v452, 7
          %v454 = vsub.s32 0, %v453
          %v455 = vrot.slane %v450, %v454
          %v457 = vadd.f32 %v446, %v455
          %v458 = vadd.f32 %v447, %v455
          %v459 = vadd.f32 %v448, %v455
          %v460 = vadd.f32 %v449, %v455
          %461 = vmax.xlane.f32.xlu0 %v457
          %v462 = vpop.xlane.xlu0 %461
          %463 = vmax.xlane.f32.xlu0 %v458
          %v464 = vpop.xlane.xlu0 %463
          %465 = vmax.xlane.f32.xlu0 %v459
          %v466 = vpop.xlane.xlu0 %465
          %467 = vmax.xlane.f32.xlu0 %v460
          %v468 = vpop.xlane.xlu0 %467
          %v469 = vsub.f32 %v457, %v462
          %v470 = vsub.f32 %v458, %v464
          %v471 = vsub.f32 %v459, %v466
          %v472 = vsub.f32 %v460, %v468
          %v473 = vmul.f32 %v469, 1.442695
          %v474 = vpow.pop %v473
          %v475 = vmul.f32 %v470, 1.442695
          %v476 = vpow.pop %v475
          %v477 = vmul.f32 %v471, 1.442695
          %v478 = vpow.pop %v477
          %v479 = vmul.f32 %v472, 1.442695
          %v480 = vpow.pop %v479
          %481 = vadd.xlane.f32.xlu0 %v474
          %v482 = vpop.xlane.xlu0 %481
          %483 = vadd.xlane.f32.xlu0 %v476
          %v484 = vpop.xlane.xlu0 %483
          %485 = vadd.xlane.f32.xlu0 %v478
          %v486 = vpop.xlane.xlu0 %485
          %487 = vadd.xlane.f32.xlu0 %v480
          %v488 = vpop.xlane.xlu0 %487
          %v489 = vrcp.pop %v482
          %v490 = vmul.f32 %v474, %v489
          %v491 = vrcp.pop %v484
          %v492 = vmul.f32 %v476, %v491
          %v493 = vrcp.pop %v486
          %v494 = vmul.f32 %v478, %v493
          %v495 = vrcp.pop %v488
          %v496 = vmul.f32 %v480, %v495
          %497 = vst [vmem:[%s228] sm:$0xff] %v490
          %498 = vst [vmem:[%s228 + $0x8] sm:$0xff] %v492
          %499 = vst [vmem:[%s228 + $0x10] sm:$0xff] %v494
          %500 = vst [vmem:[%s228 + $0x18] sm:$0xff] %v496
        $region48: #{tpu_custom_call.1} parent=31 // pred_fallthru
          _
        %s501 = sand.u32 %s116, 1
        %s502 = scalar_lea.sflag [#allocation5], %s501
        %s503 = sand.u32 %s116, 1
        %s504 = smul.addr %s503, 32
        %s505 = scalar_lea.vmem [#allocation8], %s504
        // Predicated region
        $region49: #{tpu_custom_call.1} parent=31 // pred_check
          %p506 = pneg %p126
        $region50: #{tpu_custom_call.1} parent=31 // pred_check_branch
          %508 = sbr.rel (%p506) target = $region52
        $region51: #{tpu_custom_call.1} parent=31 // pred_region
          %s509 = smul.u32 4, %s25
          %s511 = ssub.s32 512, 512
          %512 = vsyncadd %s502, %s511
          %s513 = smul.addr %s509, 128
          %s514 = scalar_lea.hbm %s3, %s513
          %s515 = sshll.u32 %s505, 4
          %s516 = int_to_ptr.vmem [resolvable:$true] %s515
          %521 = dma.vmem_to_hbm [thread:$0]  %s516, 512, %s514, %s502, 128, 128, 8
        $region52: #{tpu_custom_call.1} parent=31 // pred_fallthru
          _
      $region32: #{tpu_custom_call.1} parent=5 // pred_fallthru
        _
      %p522 = scmp.le.s32.totalorder 2, %s16
      // Predicated region
      $region53: #{tpu_custom_call.1} parent=5 // pred_check
        %p523 = pneg %p522
      $region54: #{tpu_custom_call.1} parent=5 // pred_check_branch
        %525 = sbr.rel (%p523) target = $region56
      $region55: #{tpu_custom_call.1} parent=5 // pred_region
        %s526 = ssub.s32 %s16, 2
        // Predicated region
        $region57: #{tpu_custom_call.1} parent=55 // pred_check
          %p527 = pneg %p132
        $region58: #{tpu_custom_call.1} parent=55 // pred_check_branch
          %529 = sbr.rel (%p527) target = $region60
        $region59: #{tpu_custom_call.1} parent=55 // pred_region
          %s530 = sand.u32 %s117, 1
          %s531 = scalar_lea.sflag [#allocation5], %s530
          %s532 = sand.u32 %s117, 1
          %s533 = smul.addr %s532, 32
          %s534 = scalar_lea.vmem [#allocation8], %s533
          %535 = dma.done %s531, 512
        $region60: #{tpu_custom_call.1} parent=55 // pred_fallthru
          _
      $region56: #{tpu_custom_call.1} parent=5 // pred_fallthru
        _
    $region6: #{tpu_custom_call.1} parent=1 // loop_footer
      %s20 = sadd.s32 1, %s16
    $region7: #{tpu_custom_call.1} parent=1 // loop_footer_branch
      %15 = sbr.rel target = $region3
    $region8: #{tpu_custom_call.1} parent=1 // loop_exit
      _
    %536 = vsyncpa [#allocation4], 1
    %s537 = scalar_lea.sflag [#allocation4], 1
    %538 = vsyncpa %s537, 1
    %539 = vsyncpa [#allocation7], 1
    %540 = vsyncpa [#allocation5], 1
    %s541 = scalar_lea.sflag [#allocation5], 1
    %542 = vsyncpa %s541, 1

// kernel: tpu_custom_call.1
$region0: #{tpu_custom_call.1}
  #allocation0 [shape = 'u32[]', space=smem, size = 0x4, offset = 0x4, fixed_abs, tag = 'smem constant byte address 0x4 - core index']
  #allocation1 [shape = 'u32[144,128]{1,0:T(1,128)}', space=vmem, size = 0x12000, scoped, tag = 'internal scratch']
  #allocation2 [shape = 'f32[32,128]{1,0:T(8,128)}', space=vmem, size = 0x4000, scoped, tag = 'scratch operand']
  %s0 = inlined_call_operand.hbm [shape: f32[64,256], index: 0, kind: input, shape index: {}]
  %s1 = inlined_call_operand.hbm [shape: bf16[256,128], index: 1, kind: input, shape index: {}]
  %s2 = inlined_call_operand.vmem [shape: f32[1,128], index: 2, kind: input, shape index: {}]
  %s3 = inlined_call_operand.hbm [shape: f32[64,128], index: 3, kind: output, shape index: {}]
  %s4 = sld [smem:[#allocation0]]
  $region61: #{tpu_custom_call.1} parent=0
    _
  %s6 = ssub.s32 1, %s4
  %s7 = scalar_select 0, %s6, %s4
  $region1: #{tpu_custom_call.1} parent=0
    #allocation3 [shape = 'u8[65536]{0}', space=vmem, size = 0x10000, scoped, tag = 'input window, operand 0']
    #allocation4 [shape = 's32[2]{0}', space=sflag, size = 0x8, scoped, tag = 'scoped memory for tpu_custom_call.1']
    #allocation5 [shape = 's32[2]{0}', space=sflag, size = 0x8, scoped, tag = 'scoped memory for tpu_custom_call.1']
    #allocation6 [shape = 'u8[65536]{0}', space=vmem, size = 0x10000, scoped, tag = 'input window, operand 1, single buffered']
    #allocation7 [shape = 's32[1]{0}', space=sflag, size = 0x4, scoped, tag = 'scoped memory for tpu_custom_call.1']
    #allocation8 [shape = 'u8[32768]{0}', space=vmem, size = 0x8000, scoped, tag = 'output window, operand 0']
    %8 = vsyncpa [#allocation4], 0
    %s9 = scalar_lea.sflag [#allocation4], 1
    %10 = vsyncpa %s9, 0
    %11 = vsyncpa [#allocation7], 0
    %12 = vsyncpa [#allocation5], 0
    %s13 = scalar_lea.sflag [#allocation5], 1
    %14 = vsyncpa %s13, 0
    loop: start=0, step=1, limit=4
    $region2: #{tpu_custom_call.1} parent=1 // loop_pre_header
      _
    $region3: #{tpu_custom_call.1} parent=1 // loop_header
      %s16 = sphi 0, %s20
      %p17 = scmp.ge.s32.totalorder %s16, 4
      %s23 = sphi 0, %s35
      %s24 = sphi 0, %s31
      %s25 = sphi 0, %s23
      %s26 = sphi 0, %s24
      %s27 = sphi 0, %s25
      %s28 = sphi 0, %s26
      %s40 = sphi 0, %s42
      %s43 = sphi 0, %s40
      %s44 = sphi 0, %s43
      %s60 = sphi 0, %s44
      %s66 = sphi 0, %s68
      %s69 = sphi 0, %s66
      %s70 = sphi 0, %s69
      %s86 = sphi 0, %s70
      %s90 = sphi 0, %s90
      %s92 = sphi 0, %s90
      %s93 = sphi 0, %s92
      %s107 = sphi 0, %s93
      %s113 = sphi 0, %s115
      %s116 = sphi 0, %s113
      %s117 = sphi 0, %s116
      %s133 = sphi 0, %s117
    $region4: #{tpu_custom_call.1} parent=1 // loop_header_branch
      %19 = sbr.rel (%p17) target = $region8
    $region5: #{tpu_custom_call.1} parent=1 // loop_body
      %s21 = ssub.s32 %s16, 1
      %s22 = ssub.s32 %s16, 2
      %s29 = sadd.s32 1, %s24
      %p30 = scmp.ge.s32.totalorder %s29, 1
      %s31 = scalar_select %p30, 0, %s29
      %s32 = sadd.s32 1, %s23
      %s33 = scalar_select %p30, %s32, %s23
      %p34 = scmp.ge.s32.totalorder %s33, 2
      %s35 = scalar_select %p34, 0, %s33
      %s36 = ssub.s32 %s23, %s35
      %s37 = ssub.s32 %s24, %s31
      %s38 = sor.u32 %s36, %s37
      %p39 = scmp.eq.s32.totalorder %s38, 0
      %s41 = sadd.s32 %s40, 1
      %s42 = scalar_select %p39, %s40, %s41
      %p45 = pneg %p39
      %p46 = scmp.eq.s32.totalorder %s16, 1
      %p47 = por %p45, %p46
      %p48 = scmp.ne.s32.totalorder %s40, %s43
      %p49 = scmp.eq.s32.totalorder %s16, 0
      %p50 = por %p48, %p49
      %p51 = scmp.ne.s32.totalorder %s40, %s43
      %p52 = scmp.eq.s32.totalorder %s21, 1
      %p53 = por %p51, %p52
      %p54 = scmp.ne.s32.totalorder %s43, %s44
      %p55 = scmp.eq.s32.totalorder %s21, 0
      %p56 = por %p54, %p55
      %p57 = scmp.ne.s32.totalorder %s43, %s44
      %p58 = scmp.eq.s32.totalorder %s22, 1
      %p59 = por %p57, %p58
      %p61 = scmp.ne.s32.totalorder %s44, %s60
      %p62 = scmp.eq.s32.totalorder %s22, 0
      %p63 = por %p61, %p62
      %s64 = ssub.s32 %s24, %s31
      %p65 = scmp.eq.s32.totalorder %s64, 0
      %s67 = sadd.s32 %s66, 1
      %s68 = scalar_select %p65, %s66, %s67
      %p71 = pneg %p65
      %p72 = scmp.eq.s32.totalorder %s16, 1
      %p73 = por %p71, %p72
      %p74 = scmp.ne.s32.totalorder %s66, %s69
      %p75 = scmp.eq.s32.totalorder %s16, 0
      %p76 = por %p74, %p75
      %p77 = scmp.ne.s32.totalorder %s66, %s69
      %p78 = scmp.eq.s32.totalorder %s21, 1
      %p79 = por %p77, %p78
      %p80 = scmp.ne.s32.totalorder %s69, %s70
      %p81 = scmp.eq.s32.totalorder %s21, 0
      %p82 = por %p80, %p81
      %p83 = scmp.ne.s32.totalorder %s69, %s70
      %p84 = scmp.eq.s32.totalorder %s22, 1
      %p85 = por %p83, %p84
      %p87 = scmp.ne.s32.totalorder %s70, %s86
      %p88 = scmp.eq.s32.totalorder %s22, 0
      %p89 = por %p87, %p88
      %s91 = sadd.s32 %s90, 1
      %p94 = scmp.eq.s32.totalorder %s16, 1
      %p95 = scmp.ne.s32.totalorder %s90, %s92
      %p96 = scmp.eq.s32.totalorder %s16, 0
      %p97 = por %p95, %p96
      %p98 = scmp.ne.s32.totalorder %s90, %s92
      %p99 = scmp.eq.s32.totalorder %s21, 1
      %p100 = por %p98, %p99
      %p101 = scmp.ne.s32.totalorder %s92, %s93
      %p102 = scmp.eq.s32.totalorder %s21, 0
      %p103 = por %p101, %p102
      %p104 = scmp.ne.s32.totalorder %s92, %s93
      %p105 = scmp.eq.s32.totalorder %s22, 1
      %p106 = por %p104, %p105
      %p108 = scmp.ne.s32.totalorder %s93, %s107
      %p109 = scmp.eq.s32.totalorder %s22, 0
      %p110 = por %p108, %p109
      %s111 = ssub.s32 %s23, %s35
      %p112 = scmp.eq.s32.totalorder %s111, 0
      %s114 = sadd.s32 %s113, 1
      %s115 = scalar_select %p112, %s113, %s114
      %p118 = pneg %p112
      %p119 = scmp.eq.s32.totalorder %s16, 1
      %p120 = por %p118, %p119
      %p121 = scmp.ne.s32.totalorder %s113, %s116
      %p122 = scmp.eq.s32.totalorder %s16, 0
      %p123 = por %p121, %p122
      %p124 = scmp.ne.s32.totalorder %s113, %s116
      %p125 = scmp.eq.s32.totalorder %s21, 1
      %p126 = por %p124, %p125
      %p127 = scmp.ne.s32.totalorder %s116, %s117
      %p128 = scmp.eq.s32.totalorder %s21, 0
      %p129 = por %p127, %p128
      %p130 = scmp.ne.s32.totalorder %s116, %s117
      %p131 = scmp.eq.s32.totalorder %s22, 1
      %p132 = por %p130, %p131
      %p134 = scmp.ne.s32.totalorder %s117, %s133
      %p135 = scmp.eq.s32.totalorder %s22, 0
      %p136 = por %p134, %p135
      %p137 = scmp.le.s32.totalorder 1, %s16
      %p138 = scmp.lt.s32.totalorder %s16, 3
      %p139 = pnand %p137, %p138
      %p140 = pneg %p139
      // Predicated region
      $region9: #{tpu_custom_call.1} parent=5 // pred_check
        _
      $region10: #{tpu_custom_call.1} parent=5 // pred_check_branch
        %142 = sbr.rel (%p139) target = $region12
      $region11: #{tpu_custom_call.1} parent=5 // pred_region
        %s143 = ssub.s32 %s16, 1
        // Predicated region
        $region13: #{tpu_custom_call.1} parent=11 // pred_check
          %p144 = pneg %p82
        $region14: #{tpu_custom_call.1} parent=11 // pred_check_branch
          %146 = sbr.rel (%p144) target = $region16
        $region15: #{tpu_custom_call.1} parent=11 // pred_region
          %s147 = smul.u32 32, %s26
          %s149 = ssub.s32 2048, 2048
          %150 = vsyncadd [#allocation7], %s149
          %s151 = smul.addr %s147, 64
          %s152 = scalar_lea.hbm %s1, %s151
          %s153 = sshll.u32 [#allocation6], 4
          %s154 = int_to_ptr.vmem [resolvable:$true] %s153
          %159 = dma.hbm_to_vmem [thread:$0]  %s152, 2048, %s154, [#allocation7], 64, 64, 4
        $region16: #{tpu_custom_call.1} parent=11 // pred_fallthru
          _
        // Predicated region
        $region17: #{tpu_custom_call.1} parent=11 // pred_check
          %p160 = pneg %p103
        $region18: #{tpu_custom_call.1} parent=11 // pred_check_branch
          %162 = sbr.rel (%p160) target = $region20
        $region19: #{tpu_custom_call.1} parent=11 // pred_region
          _
        $region20: #{tpu_custom_call.1} parent=11 // pred_fallthru
          _
      $region12: #{tpu_custom_call.1} parent=5 // pred_fallthru
        _
      %p163 = scmp.lt.s32.totalorder %s16, 2
      // Predicated region
      $region21: #{tpu_custom_call.1} parent=5 // pred_check
        %p164 = pneg %p163
      $region22: #{tpu_custom_call.1} parent=5 // pred_check_branch
        %166 = sbr.rel (%p164) target = $region24
      $region23: #{tpu_custom_call.1} parent=5 // pred_region
        // Predicated region
        $region25: #{tpu_custom_call.1} parent=23 // pred_check
          %p167 = pneg %p50
        $region26: #{tpu_custom_call.1} parent=23 // pred_check_branch
          %169 = sbr.rel (%p167) target = $region28
        $region27: #{tpu_custom_call.1} parent=23 // pred_region
          %s170 = sand.u32 %s40, 1
          %s171 = scalar_lea.sflag [#allocation4], %s170
          %s172 = sand.u32 %s40, 1
          %s173 = smul.addr %s172, 64
          %s174 = scalar_lea.vmem [#allocation3], %s173
          %s175 = smul.u32 4, %s23
          %s176 = smul.u32 2, %s24
          %s178 = ssub.s32 1024, 1024
          %179 = vsyncadd %s171, %s178
          %s180 = smul.addr %s175, 2
          %s181 = sadd.s32 %s176, %s180
          %s182 = smul.addr %s181, 128
          %s183 = scalar_lea.hbm %s0, %s182
          %s184 = sshll.u32 %s174, 4
          %s185 = int_to_ptr.vmem [resolvable:$true] %s184
          %190 = dma.hbm_to_vmem [thread:$0]  %s183, 1024, %s185, %s171, 256, 256, 16
        $region28: #{tpu_custom_call.1} parent=23 // pred_fallthru
          _
      $region24: #{tpu_custom_call.1} parent=5 // pred_fallthru
        _
      %p191 = scmp.le.s32.totalorder 1, %s16
      %p192 = scmp.lt.s32.totalorder %s16, 3
      %p193 = pnand %p191, %p192
      %p194 = pneg %p193
      // Predicated region
      $region29: #{tpu_custom_call.1} parent=5 // pred_check
        _
      $region30: #{tpu_custom_call.1} parent=5 // pred_check_branch
        %196 = sbr.rel (%p193) target = $region32
      $region31: #{tpu_custom_call.1} parent=5 // pred_region
        %s197 = ssub.s32 %s16, 1
        %s198 = sand.u32 %s43, 1
        %s199 = scalar_lea.sflag [#allocation4], %s198
        %s200 = sand.u32 %s43, 1
        %s201 = smul.addr %s200, 64
        %s202 = scalar_lea.vmem [#allocation3], %s201
        // Predicated region
        $region33: #{tpu_custom_call.1} parent=31 // pred_check
          %p203 = pneg %p56
        $region34: #{tpu_custom_call.1} parent=31 // pred_check_branch
          %205 = sbr.rel (%p203) target = $region36
        $region35: #{tpu_custom_call.1} parent=31 // pred_region
          %206 = dma.done %s199, 1024
        $region36: #{tpu_custom_call.1} parent=31 // pred_fallthru
          _
        // Predicated region
        $region37: #{tpu_custom_call.1} parent=31 // pred_check
          %p207 = pneg %p82
        $region38: #{tpu_custom_call.1} parent=31 // pred_check_branch
          %209 = sbr.rel (%p207) target = $region40
        $region39: #{tpu_custom_call.1} parent=31 // pred_region
          %210 = dma.done [#allocation7], 2048
        $region40: #{tpu_custom_call.1} parent=31 // pred_fallthru
          _
        %s211 = sand.u32 %s43, 1
        %s212 = scalar_lea.sflag [#allocation4], %s211
        %s213 = sand.u32 %s43, 1
        %s214 = smul.addr %s213, 64
        %s215 = scalar_lea.vmem [#allocation3], %s214
        %p216 = pneg %p56
        %p217 = pneg %p53
        %p218 = pneg %p82
        %p219 = pneg %p79
        %p220 = pneg %p103
        %p221 = pneg %p100
        %p222 = pneg %p129
        %p223 = pneg %p126
        %s224 = sand.u32 %s116, 1
        %s225 = scalar_lea.sflag [#allocation5], %s224
        %s226 = sand.u32 %s116, 1
        %s227 = smul.addr %s226, 32
        %s228 = scalar_lea.vmem [#allocation8], %s227
        %s229 = smul.u32 4, %s25
        %s230 = smul.u32 2, %s26
        %s231 = smul.u32 32, %s26
        %s232 = smul.u32 4, %s25
        %p234 = scmp.eq.s32.totalorder %s26, 0
        // Predicated region
        $region41: #{tpu_custom_call.1} parent=31 // pred_check
          %p235 = pneg %p234
        $region42: #{tpu_custom_call.1} parent=31 // pred_check_branch
          %237 = sbr.rel (%p235) target = $region44
        $region43: #{tpu_custom_call.1} parent=31 // pred_region
          %238 = vst [vmem:[#allocation2] sm:$0xff] 0.0
          %239 = vst [vmem:[#allocation2 + $0x8] sm:$0xff] 0.0
          %240 = vst [vmem:[#allocation2 + $0x10] sm:$0xff] 0.0
          %241 = vst [vmem:[#allocation2 + $0x18] sm:$0xff] 0.0
        $region44: #{tpu_custom_call.1} parent=31 // pred_fallthru
          _
        %v242 = vld [vmem:[#allocation2] sm:$0xff]
        %v243 = vld [vmem:[#allocation2 + $0x8] sm:$0xff]
        %v244 = vld [vmem:[#allocation2 + $0x10] sm:$0xff]
        %v245 = vld [vmem:[#allocation2 + $0x18] sm:$0xff]
        %v246 = vld [vmem:[%s202] sm:$0xff]
        %v247 = vld [vmem:[%s202 + $0x8] sm:$0xff]
        %v248 = vld [vmem:[%s202 + $0x10] sm:$0xff]
        %v249 = vld [vmem:[%s202 + $0x18] sm:$0xff]
        %v250 = vld [vmem:[%s202 + $0x20] sm:$0xff]
        %v251 = vld [vmem:[%s202 + $0x28] sm:$0xff]
        %v252 = vld [vmem:[%s202 + $0x30] sm:$0xff]
        %v253 = vld [vmem:[%s202 + $0x38] sm:$0xff]
        %v254 = vpack.c.bf16 %v248, %v246
        %v255 = vpack.c.bf16 %v249, %v247
        %v256 = vpack.c.bf16 %v252, %v250
        %v257 = vpack.c.bf16 %v253, %v251
        %v258 = vld [vmem:[#allocation6] sm:$0xf]
        %v259 = vld [vmem:[#allocation6 + $0x4] sm:$0xf]
        %v260 = vld [vmem:[#allocation6 + $0x8] sm:$0xf]
        %v261 = vld [vmem:[#allocation6 + $0xc] sm:$0xf]
        %v262 = vld [vmem:[#allocation6 + $0x10] sm:$0xf]
        %v263 = vld [vmem:[#allocation6 + $0x14] sm:$0xf]
        %v264 = vld [vmem:[#allocation6 + $0x18] sm:$0xf]
        %v265 = vld [vmem:[#allocation6 + $0x1c] sm:$0xf]
        %v266 = vld [vmem:[#allocation6 + $0x20] sm:$0xf]
        %v267 = vld [vmem:[#allocation6 + $0x24] sm:$0xf]
        %v268 = vld [vmem:[#allocation6 + $0x28] sm:$0xf]
        %v269 = vld [vmem:[#allocation6 + $0x2c] sm:$0xf]
        %v270 = vld [vmem:[#allocation6 + $0x30] sm:$0xf]
        %v271 = vld [vmem:[#allocation6 + $0x34] sm:$0xf]
        %v272 = vld [vmem:[#allocation6 + $0x38] sm:$0xf]
        %v273 = vld [vmem:[#allocation6 + $0x3c] sm:$0xf]
        %v274 = vld [vmem:[#allocation6 + $0x40] sm:$0xf]
        %v275 = vld [vmem:[#allocation6 + $0x44] sm:$0xf]
        %v276 = vld [vmem:[#allocation6 + $0x48] sm:$0xf]
        %v277 = vld [vmem:[#allocation6 + $0x4c] sm:$0xf]
        %v278 = vld [vmem:[#allocation6 + $0x50] sm:$0xf]
        %v279 = vld [vmem:[#allocation6 + $0x54] sm:$0xf]
        %v280 = vld [vmem:[#allocation6 + $0x58] sm:$0xf]
        %v281 = vld [vmem:[#allocation6 + $0x5c] sm:$0xf]
        %v282 = vld [vmem:[#allocation6 + $0x60] sm:$0xf]
        %v283 = vld [vmem:[#allocation6 + $0x64] sm:$0xf]
        %v284 = vld [vmem:[#allocation6 + $0x68] sm:$0xf]
        %v285 = vld [vmem:[#allocation6 + $0x6c] sm:$0xf]
        %v286 = vld [vmem:[#allocation6 + $0x70] sm:$0xf]
        %v287 = vld [vmem:[#allocation6 + $0x74] sm:$0xf]
        %v288 = vld [vmem:[#allocation6 + $0x78] sm:$0xf]
        %v289 = vld [vmem:[#allocation6 + $0x7c] sm:$0xf]
        %v322 = vunpack.c.l.b16 %v258
        %v323 = vunpack.c.l.b16 %v259
        %v324 = vunpack.c.l.b16 %v260
        %v325 = vunpack.c.l.b16 %v261
        %v326 = vunpack.c.l.b16 %v262
        %v327 = vunpack.c.l.b16 %v263
        %v328 = vunpack.c.l.b16 %v264
        %v329 = vunpack.c.l.b16 %v265
        %v330 = vunpack.c.l.b16 %v266
        %v331 = vunpack.c.l.b16 %v267
        %v332 = vunpack.c.l.b16 %v268
        %v333 = vunpack.c.l.b16 %v269
        %v334 = vunpack.c.l.b16 %v270
        %v335 = vunpack.c.l.b16 %v271
        %v336 = vunpack.c.l.b16 %v272
        %v337 = vunpack.c.l.b16 %v273
        %v338 = vunpack.c.l.b16 %v274
        %v339 = vunpack.c.l.b16 %v275
        %v340 = vunpack.c.l.b16 %v276
        %v341 = vunpack.c.l.b16 %v277
        %v342 = vunpack.c.l.b16 %v278
        %v343 = vunpack.c.l.b16 %v279
        %v344 = vunpack.c.l.b16 %v280
        %v345 = vunpack.c.l.b16 %v281
        %v346 = vunpack.c.l.b16 %v282
        %v347 = vunpack.c.l.b16 %v283
        %v348 = vunpack.c.l.b16 %v284
        %v349 = vunpack.c.l.b16 %v285
        %v350 = vunpack.c.l.b16 %v286
        %v351 = vunpack.c.l.b16 %v287
        %v352 = vunpack.c.l.b16 %v288
        %v353 = vunpack.c.l.b16 %v289
        %v354 = vpack.c.b16 %v323, %v322
        %v355 = vpack.c.b16 %v325, %v324
        %v356 = vpack.c.b16 %v327, %v326
        %v357 = vpack.c.b16 %v329, %v328
        %v358 = vpack.c.b16 %v331, %v330
        %v359 = vpack.c.b16 %v333, %v332
        %v360 = vpack.c.b16 %v335, %v334
        %v361 = vpack.c.b16 %v337, %v336
        %v362 = vpack.c.b16 %v339, %v338
        %v363 = vpack.c.b16 %v341, %v340
        %v364 = vpack.c.b16 %v343, %v342
        %v365 = vpack.c.b16 %v345, %v344
        %v366 = vpack.c.b16 %v347, %v346
        %v367 = vpack.c.b16 %v349, %v348
        %v368 = vpack.c.b16 %v351, %v350
        %v369 = vpack.c.b16 %v353, %v352
        %386 = vmatprep.subr.bf16.mxu0 0
        %387 = vmatpush1.bf16.msra.mxu0 %v361
        %388 = vmatprep.subr.bf16.mxu0 0
        %389 = vmatpush1.bf16.msra.mxu0 %v360
        %390 = vmatprep.subr.bf16.mxu0 0
        %391 = vmatpush1.bf16.msra.mxu0 %v359
        %392 = vmatprep.subr.bf16.mxu0 0
        %393 = vmatpush1.bf16.msra.mxu0 %v358
        %394 = vmatprep.subr.bf16.mxu0 0
        %395 = vmatpush1.bf16.msra.mxu0 %v357
        %396 = vmatprep.subr.bf16.mxu0 0
        %397 = vmatpush1.bf16.msra.mxu0 %v356
        %398 = vmatprep.subr.bf16.mxu0 0
        %399 = vmatpush1.bf16.msra.mxu0 %v355
        %400 = vmatprep.subr.bf16.mxu0 0
        %401 = vmatpush1.bf16.msra.mxu0 %v354
        %402 = vmatprep.subr.bf16.mxu0 0
        %403 = vmatpush2.bf16.msra.mxu0 %v369
        %404 = vmatprep.subr.bf16.mxu0 0
        %405 = vmatpush2.bf16.msra.mxu0 %v368
        %406 = vmatprep.subr.bf16.mxu0 0
        %407 = vmatpush2.bf16.msra.mxu0 %v367
        %408 = vmatprep.subr.bf16.mxu0 0
        %409 = vmatpush2.bf16.msra.mxu0 %v366
        %410 = vmatprep.subr.bf16.mxu0 0
        %411 = vmatpush2.bf16.msra.mxu0 %v365
        %412 = vmatprep.subr.bf16.mxu0 0
        %413 = vmatpush2.bf16.msra.mxu0 %v364
        %414 = vmatprep.subr.bf16.mxu0 0
        %415 = vmatpush2.bf16.msra.mxu0 %v363
        %416 = vmatprep.subr.bf16.mxu0 0
        %417 = vmatpush2.bf16.msra.mxu0 %v362
        %418 = vmatprep.mubr.bf16.mxu0 %v255
        %419 = vmatmul.mubr.bf16.gmra.mxu0 %v254
        %v420 = vpop.f32.mrf.mxu0
        %v421 = vadd.f32 0.0, %v420
        %v422 = vpop.f32.mrf.mxu0
        %v423 = vpop.f32.mrf.mxu0
        %v424 = vadd.f32 0.0, %v423
        %v425 = vpop.f32.mrf.mxu0
        %426 = vmatprep.mubr.bf16.mxu0 %v257
        %427 = vmatmul.mubr.bf16.gmra.mxu0 %v256
        %v428 = vpop.f32.mrf.mxu0
        %v429 = vadd.f32 0.0, %v428
        %v430 = vpop.f32.mrf.mxu0
        %v431 = vpop.f32.mrf.mxu0
        %v432 = vadd.f32 0.0, %v431
        %v433 = vpop.f32.mrf.mxu0
        %434 = vdwg.mxu0
        %v435 = vadd.f32 %v242, %v421
        %v436 = vadd.f32 %v243, %v424
        %v437 = vadd.f32 %v244, %v429
        %v438 = vadd.f32 %v245, %v432
        %439 = vst [vmem:[#allocation2] sm:$0xff] %v435
        %440 = vst [vmem:[#allocation2 + $0x8] sm:$0xff] %v436
        %441 = vst [vmem:[#allocation2 + $0x10] sm:$0xff] %v437
        %442 = vst [vmem:[#allocation2 + $0x18] sm:$0xff] %v438
        // Predicated region
        $region45: #{tpu_custom_call.1} parent=31 // pred_check
          %p443 = pneg %p234
        $region46: #{tpu_custom_call.1} parent=31 // pred_check_branch
          %445 = sbr.rel (%p443) target = $region48
        $region47: #{tpu_custom_call.1} parent=31 // pred_region
          %v446 = vld [vmem:[#allocation2] sm:$0xff]
          %v447 = vld [vmem:[#allocation2 + $0x8] sm:$0xff]
          %v448 = vld [vmem:[#allocation2 + $0x10] sm:$0xff]
          %v449 = vld [vmem:[#allocation2 + $0x18] sm:$0xff]
          %v450 = vld [vmem:[%s2] sm:$0x1]
          %v452 = vlaneseq
          %v453 = vshrl.u32 %v452, 7
          %v454 = vsub.s32 0, %v453
          %v455 = vrot.slane %v450, %v454
          %v457 = vadd.f32 %v446, %v455
          %v458 = vadd.f32 %v447, %v455
          %v459 = vadd.f32 %v448, %v455
          %v460 = vadd.f32 %v449, %v455
          %461 = vmax.xlane.f32.xlu0 %v457
          %v462 = vpop.xlane.xlu0 %461
          %463 = vmax.xlane.f32.xlu0 %v458
          %v464 = vpop.xlane.xlu0 %463
          %465 = vmax.xlane.f32.xlu0 %v459
          %v466 = vpop.xlane.xlu0 %465
          %467 = vmax.xlane.f32.xlu0 %v460
          %v468 = vpop.xlane.xlu0 %467
          %v469 = vsub.f32 %v457, %v462
          %v470 = vsub.f32 %v458, %v464
          %v471 = vsub.f32 %v459, %v466
          %v472 = vsub.f32 %v460, %v468
          %v473 = vmul.f32 %v469, 1.442695
          %v474 = vpow.pop %v473
          %v475 = vmul.f32 %v470, 1.442695
          %v476 = vpow.pop %v475
          %v477 = vmul.f32 %v471, 1.442695
          %v478 = vpow.pop %v477
          %v479 = vmul.f32 %v472, 1.442695
          %v480 = vpow.pop %v479
          %481 = vadd.xlane.f32.xlu0 %v474
          %v482 = vpop.xlane.xlu0 %481
          %483 = vadd.xlane.f32.xlu0 %v476
          %v484 = vpop.xlane.xlu0 %483
          %485 = vadd.xlane.f32.xlu0 %v478
          %v486 = vpop.xlane.xlu0 %485
          %487 = vadd.xlane.f32.xlu0 %v480
          %v488 = vpop.xlane.xlu0 %487
          %v489 = vrcp.pop %v482
          %v490 = vmul.f32 %v474, %v489
          %v491 = vrcp.pop %v484
          %v492 = vmul.f32 %v476, %v491
          %v493 = vrcp.pop %v486
          %v494 = vmul.f32 %v478, %v493
          %v495 = vrcp.pop %v488
          %v496 = vmul.f32 %v480, %v495
          %497 = vst [vmem:[%s228] sm:$0xff] %v490
          %498 = vst [vmem:[%s228 + $0x8] sm:$0xff] %v492
          %499 = vst [vmem:[%s228 + $0x10] sm:$0xff] %v494
          %500 = vst [vmem:[%s228 + $0x18] sm:$0xff] %v496
        $region48: #{tpu_custom_call.1} parent=31 // pred_fallthru
          _
        %s501 = sand.u32 %s116, 1
        %s502 = scalar_lea.sflag [#allocation5], %s501
        %s503 = sand.u32 %s116, 1
        %s504 = smul.addr %s503, 32
        %s505 = scalar_lea.vmem [#allocation8], %s504
        // Predicated region
        $region49: #{tpu_custom_call.1} parent=31 // pred_check
          %p506 = pneg %p126
        $region50: #{tpu_custom_call.1} parent=31 // pred_check_branch
          %508 = sbr.rel (%p506) target = $region52
        $region51: #{tpu_custom_call.1} parent=31 // pred_region
          %s509 = smul.u32 4, %s25
          %s511 = ssub.s32 512, 512
          %512 = vsyncadd %s502, %s511
          %s513 = smul.addr %s509, 128
          %s514 = scalar_lea.hbm %s3, %s513
          %s515 = sshll.u32 %s505, 4
          %s516 = int_to_ptr.vmem [resolvable:$true] %s515
          %521 = dma.vmem_to_hbm [thread:$0]  %s516, 512, %s514, %s502, 128, 128, 8
        $region52: #{tpu_custom_call.1} parent=31 // pred_fallthru
          _
      $region32: #{tpu_custom_call.1} parent=5 // pred_fallthru
        _
      %p522 = scmp.le.s32.totalorder 2, %s16
      // Predicated region
      $region53: #{tpu_custom_call.1} parent=5 // pred_check
        %p523 = pneg %p522
      $region54: #{tpu_custom_call.1} parent=5 // pred_check_branch
        %525 = sbr.rel (%p523) target = $region56
      $region55: #{tpu_custom_call.1} parent=5 // pred_region
        %s526 = ssub.s32 %s16, 2
        // Predicated region
        $region57: #{tpu_custom_call.1} parent=55 // pred_check
          %p527 = pneg %p132
        $region58: #{tpu_custom_call.1} parent=55 // pred_check_branch
          %529 = sbr.rel (%p527) target = $region60
        $region59: #{tpu_custom_call.1} parent=55 // pred_region
          %s530 = sand.u32 %s117, 1
          %s531 = scalar_lea.sflag [#allocation5], %s530
          %s532 = sand.u32 %s117, 1
          %s533 = smul.addr %s532, 32
          %s534 = scalar_lea.vmem [#allocation8], %s533
          %535 = dma.done %s531, 512
        $region60: #{tpu_custom_call.1} parent=55 // pred_fallthru
          _
      $region56: #{tpu_custom_call.1} parent=5 // pred_fallthru
        _
    $region6: #{tpu_custom_call.1} parent=1 // loop_footer
      %s20 = sadd.s32 1, %s16
    $region7: #{tpu_custom_call.1} parent=1 // loop_footer_branch
      %15 = sbr.rel target = $region3
    $region8: #{tpu_custom_call.1} parent=1 // loop_exit
      _
    %536 = vsyncpa [#allocation4], 1
    %s537 = scalar_lea.sflag [#allocation4], 1
    %538 = vsyncpa %s537, 1
    %539 = vsyncpa [#allocation7], 1
    %540 = vsyncpa [#allocation5], 1
    %s541 = scalar_lea.sflag [#allocation5], 1
    %542 = vsyncpa %s541, 1

</llo_original>
